<compile_context>
chip_gen: v7x
topology: tpu7x:2x2x1
jax: 0.10.0
libtpu: 0.0.40
codegen_flags: <defaults>
</compile_context>

<pallas_src>
import jax
import jax.numpy as jnp
from jax.experimental import pallas as pl
from jax.experimental.pallas import tpu as pltpu


def _round_up(x, m):
    return (x + m - 1) // m * m


def _pad2(a, rows, cols, fill=0.0):
    r, c = a.shape
    if r == rows and c == cols:
        return a
    return jnp.full((rows, cols), fill, a.dtype).at[:r, :c].set(a)


def _pick_tile(padded_total, block, granule):
    """Smallest tile (multiple of `granule`) that covers padded_total in
    ceil(padded_total / block) steps -> minimal padding for a given max block."""
    blocks = -(-padded_total // block)
    t = -(-padded_total // blocks)
    return _round_up(t, granule)


def _default_vmem_limit():
    # ~100 MiB on v5e/v6e (128 MiB physical), ~56 MiB on v7x (64 MiB physical).
    try:
        cap = int(pltpu.get_tpu_info().vmem_capacity_bytes)
    except Exception:
        cap = 64 * 1024 * 1024
    return int(min(cap - 8 * 1024 * 1024, 100 * 1024 * 1024))


# ---------------------------------------------------------------------------
# Fused kernel.
# Grid: (gi, gj, gk) = (m/tm, n_hid/tn, n_in/tk), reduction axis k last.
#   y tile   (tm, tn) f32 : resident accumulator across k (index map (i, j)).
#   sreg tile (8, tn) f32 : per-(i, j) partial sums of w_hat^2 (index map (i, j)).
# ---------------------------------------------------------------------------
def _fused_kernel_layer(x_ref, w_ref, u_ref, vt_ref, usq_ref, vsq_ref, b_ref,
                        y_ref, sreg_ref):
    k = pl.program_id(2)
    nk = pl.num_programs(2)

    # --- RBF local kernel gate, quadratic expansion (cross term on the MXU) ---
    cross = jnp.dot(u_ref[...], vt_ref[...], preferred_element_type=jnp.float32)
    dist2 = usq_ref[...] + vsq_ref[...] - 2.0 * cross       # (tk,1)+(1,tn)-(tk,tn)
    w_hat = jnp.maximum(1.0 - dist2, 0.0)                    # f32 (tk, tn)

    # Gated weight tile in the matmul dtype (bf16).  Padded rows/cols of W are
    # zero and padded u/v are poisoned (w_hat == 0), so no masking is needed.
    w_eff = (w_ref[...].astype(jnp.float32) * w_hat).astype(x_ref.dtype)

    @pl.when(k == 0)
    def _():
        y_ref[...] = jnp.zeros_like(y_ref)
        sreg_ref[...] = jnp.zeros_like(sreg_ref)

    y_ref[...] += jnp.dot(x_ref[...], w_eff, preferred_element_type=jnp.float32)

    # Sparse-reg partial: fold w_hat^2 (tk, tn) into an (8, tn) slab.  The
    # reshape only splits the sublane-major axis, so the sum is plain VALU adds.
    tk_, tn_ = w_hat.shape
    w2 = w_hat * w_hat
    sreg_ref[...] += jnp.sum(w2.reshape(tk_ // 8, 8, tn_), axis=0)

    @pl.when(k == nk - 1)
    def _():
        y_ref[...] = jax.nn.sigmoid(y_ref[...] + b_ref[...])


def kernel_layer_forward(x, W, u, v, b, lambda_s, lambda_2, *,
                         use_bf16=True, block_m=256, block_n=1024, block_k=1024):
    m, n_in = x.shape
    n_hid = W.shape[1]
    n_dim = u.shape[-1]

    # ---- layout plumbing (wrapper-side, free) ----
    u2 = u.reshape(n_in, n_dim).astype(jnp.float32)
    vt = v.reshape(n_hid, n_dim).T.astype(jnp.float32)        # (n_dim, n_hid)
    b2 = b.reshape(1, n_hid).astype(jnp.float32)

    # ---- tile selection (lane-dense: tn/tk multiples of 128, tm of 16) ----
    m_base = _round_up(m, 16)
    k_base = _round_up(n_in, 128)
    n_base = _round_up(n_hid, 128)

    tm = _pick_tile(m_base, max(16, _round_up(block_m, 16)), 16)
    tk = _pick_tile(k_base, max(128, _round_up(block_k, 128)), 128)
    tn = _pick_tile(n_base, max(128, _round_up(block_n, 128)), 128)

    m_p = _round_up(m_base, tm)
    n_in_p = _round_up(k_base, tk)
    n_hid_p = _round_up(n_base, tn)

    gi = m_p // tm
    # If both parallel axes collapse to one tile, split tn so the second
    # TensorCore on v7x gets work (no effect on single-TC v5e/v6e).
    if gi == 1 and n_hid_p // tn == 1 and tn % 256 == 0:
        tn //= 2
    gj = n_hid_p // tn
    gk = n_in_p // tk

    # ---- padded operands ----
    POISON = 100.0  # makes dist^2 >> 1 -> w_hat == 0 on any padded row/col
    mm_dtype = jnp.bfloat16 if use_bf16 else jnp.float32

    x_p = _pad2(x.astype(jnp.float32), m_p, n_in_p).astype(mm_dtype)
    W_p = _pad2(W.astype(jnp.float32), n_in_p, n_hid_p).astype(mm_dtype)
    u_p = _pad2(u2, n_in_p, n_dim, fill=POISON)
    vt_p = _pad2(vt, n_dim, n_hid_p, fill=-POISON)
    b_p = _pad2(b2, 1, n_hid_p)
    usq = jnp.sum(u_p * u_p, axis=1, keepdims=True)            # (n_in_p, 1)
    vsq = jnp.sum(vt_p * vt_p, axis=0, keepdims=True)          # (1, n_hid_p)

    vmem_limit = _default_vmem_limit()

    y_p, sreg_part = pl.pallas_call(
        _fused_kernel_layer,
        grid=(gi, gj, gk),
        in_specs=[
            pl.BlockSpec((tm, tk), lambda i, j, k: (i, k)),        # x
            pl.BlockSpec((tk, tn), lambda i, j, k: (k, j)),        # W (bf16)
            pl.BlockSpec((tk, n_dim), lambda i, j, k: (k, 0)),     # u
            pl.BlockSpec((n_dim, tn), lambda i, j, k: (0, j)),     # v^T
            pl.BlockSpec((tk, 1), lambda i, j, k: (k, 0)),         # ||u||^2
            pl.BlockSpec((1, tn), lambda i, j, k: (0, j)),         # ||v||^2
            pl.BlockSpec((1, tn), lambda i, j, k: (0, j)),         # bias
        ],
        out_specs=(
            pl.BlockSpec((tm, tn), lambda i, j, k: (i, j)),        # y (accumulator)
            pl.BlockSpec((8, tn), lambda i, j, k: (i, j)),         # sreg partials
        ),
        out_shape=(
            jax.ShapeDtypeStruct((m_p, n_hid_p), jnp.float32),
            jax.ShapeDtypeStruct((gi * 8, n_hid_p), jnp.float32),
        ),
        compiler_params=pltpu.CompilerParams(
            dimension_semantics=("parallel", "parallel", "arbitrary"),
            vmem_limit_bytes=vmem_limit),
    )(x_p, W_p, u_p, vt_p, usq, vsq, b_p)

    # Regularization terms (scalar finishers in the wrapper).
    # w_hat is identical for every i, so rows [0:8] of the partial slab already
    # cover the whole (n_in, n_hid) sum; padded entries contribute exactly 0.
    sparse_reg = jnp.sum(sreg_part[:8, :]) / float(n_in * n_hid)
    l2_reg = jnp.mean(jnp.square(W.astype(jnp.float32)))
    reg = lambda_s * sparse_reg + lambda_2 * l2_reg

    y = y_p[:m, :n_hid].astype(x.dtype)
    return y, reg


# ---------------------------------------------------------------------------
# Reference + test harness
# ---------------------------------------------------------------------------
def _xavier_uniform(key, shape, fan_in, fan_out, gain):
    bound = gain * (6.0 / (fan_in + fan_out)) ** 0.5
    return jax.random.uniform(key, shape, jnp.float32, -bound, bound)


def _reference(x, W, u, v, b, lambda_s, lambda_2):
    diff = u - v                                    # (n_in, n_hid, n_dim)
    dist = jnp.sqrt(jnp.sum(diff * diff, axis=2))
    w_hat = jnp.clip(1.0 - dist ** 2, 0.0, None)
    sparse_reg = jnp.mean(w_hat ** 2)
    l2_reg = jnp.mean(W ** 2)
    y = jax.nn.sigmoid(x @ (W * w_hat) + b)
    return y, lambda_s * sparse_reg + lambda_2 * l2_reg


if __name__ == "__main__":
    lambda_s, lambda_2 = 0.006, 20.0
    gain = 2.0 ** 0.5  # calculate_gain('relu')

    def make_inputs(key, batch, n_in, n_hid, n_dim):
        kx, kw, ku, kv = jax.random.split(key, 4)
        x = jax.random.uniform(kx, (batch, n_in), jnp.float32)
        W = _xavier_uniform(kw, (n_in, n_hid), n_in, n_hid, gain)
        u = _xavier_uniform(ku, (n_in, 1, n_dim), n_dim, n_in * n_dim, gain)
        v = _xavier_uniform(kv, (1, n_hid, n_dim), n_hid * n_dim, n_dim, gain)
        b = jnp.zeros((n_hid,), jnp.float32)
        return x, W, u, v, b

    def check(x, W, u, v, b, y, reg):
        y_ref, reg_ref = _reference(x, W, u, v, b, lambda_s, lambda_2)
        assert y.shape == y_ref.shape, (y.shape, y_ref.shape)
        assert jnp.allclose(y, y_ref, atol=2e-2, rtol=2e-2), \
            float(jnp.max(jnp.abs(y - y_ref)))
        assert jnp.allclose(reg, reg_ref, atol=1e-4, rtol=1e-4), \
            (float(reg), float(reg_ref))

    # Test 1: small shapes consistent with the module (single-tile path).
    x, W, u, v, b = make_inputs(jax.random.PRNGKey(0), 8, 32, 32, 8)
    y, reg = kernel_layer_forward(x, W, u, v, b, lambda_s, lambda_2)
    jax.block_until_ready((y, reg))
    check(x, W, u, v, b, y, reg)

    # Test 2: non-aligned shapes with deliberately small tiles to exercise the
    # multi-tile grid, the resident-k accumulator, the per-(i,j) sreg partials,
    # and the poison padding.  (Production tiles stay at the 256+ defaults.)
    x2, W2, u2, v2, b2 = make_inputs(jax.random.PRNGKey(1), 40, 300, 200, 5)
    y2, reg2 = kernel_layer_forward(x2, W2, u2, v2, b2, lambda_s, lambda_2,
                                    block_m=16, block_n=128, block_k=128)
    jax.block_until_ready((y2, reg2))
    check(x2, W2, u2, v2, b2, y2, reg2)

    # Test 3: single (i, j) tile that triggers the tn split heuristic (gj -> 2)
    # so both v7x TensorCores get work.
    x3, W3, u3, v3, b3 = make_inputs(jax.random.PRNGKey(2), 8, 64, 512, 6)
    y3, reg3 = kernel_layer_forward(x3, W3, u3, v3, b3, lambda_s, lambda_2)
    jax.block_until_ready((y3, reg3))
    check(x3, W3, u3, v3, b3, y3, reg3)

    print("KERNEL_OK")
</pallas_src>

<mosaic_0001>
module attributes {stable_mosaic.version = 11 : i64} {
  func.func @_fused_kernel_layer(%arg0: i32, %arg1: i32, %arg2: i32, %arg3: memref<16x128xbf16, #tpu.memory_space<vmem>>, %arg4: memref<128x128xbf16, #tpu.memory_space<vmem>>, %arg5: memref<128x8xf32, #tpu.memory_space<vmem>>, %arg6: memref<8x128xf32, #tpu.memory_space<vmem>>, %arg7: memref<128x1xf32, #tpu.memory_space<vmem>>, %arg8: memref<1x128xf32, #tpu.memory_space<vmem>>, %arg9: memref<1x128xf32, #tpu.memory_space<vmem>>, %arg10: memref<16x128xf32, #tpu.memory_space<vmem>>, %arg11: memref<8x128xf32, #tpu.memory_space<vmem>>) attributes {dimension_semantics = [#tpu.dimension_semantics<parallel>, #tpu.dimension_semantics<parallel>, #tpu.dimension_semantics<arbitrary>], iteration_bounds = array<i64: 1, 1, 1>, scalar_prefetch = 0 : i64, scratch_operands = 0 : i64, tpu.core_type = #tpu.core_type<tc>, window_params = [{transform_indices = @transform_0, window_bounds = array<i64: 16, 128>}, {transform_indices = @transform_1, window_bounds = array<i64: 128, 128>}, {transform_indices = @transform_2, window_bounds = array<i64: 128, 8>}, {transform_indices = @transform_3, window_bounds = array<i64: 8, 128>}, {transform_indices = @transform_4, window_bounds = array<i64: 128, 1>}, {transform_indices = @transform_5, window_bounds = array<i64: 1, 128>}, {transform_indices = @transform_6, window_bounds = array<i64: 1, 128>}, {transform_indices = @transform_7, window_bounds = array<i64: 16, 128>}, {transform_indices = @transform_8, window_bounds = array<i64: 8, 128>}]} {
    %c0 = arith.constant 0 : index
    %c0_0 = arith.constant 0 : index
    %0 = vector.load %arg5[%c0, %c0_0] : memref<128x8xf32, #tpu.memory_space<vmem>>, vector<128x8xf32>
    %c0_1 = arith.constant 0 : index
    %c0_2 = arith.constant 0 : index
    %1 = vector.load %arg6[%c0_1, %c0_2] : memref<8x128xf32, #tpu.memory_space<vmem>>, vector<8x128xf32>
    %cst = arith.constant dense<0.000000e+00> : vector<128x128xf32>
    %2 = tpu.matmul %0, %1, %cst {dimension_numbers = #tpu.dot_dimension_numbers<[1], [0], [0], [1], [0, 0, 1, 1], [], []>} : vector<128x8xf32>, vector<8x128xf32>, vector<128x128xf32> -> vector<128x128xf32>
    %c0_3 = arith.constant 0 : index
    %c0_4 = arith.constant 0 : index
    %3 = vector.load %arg7[%c0_3, %c0_4] : memref<128x1xf32, #tpu.memory_space<vmem>>, vector<128x1xf32>
    %c0_5 = arith.constant 0 : index
    %c0_6 = arith.constant 0 : index
    %4 = vector.load %arg8[%c0_5, %c0_6] : memref<1x128xf32, #tpu.memory_space<vmem>>, vector<1x128xf32>
    %5 = vector.broadcast %3 : vector<128x1xf32> to vector<128x128xf32>
    %6 = vector.broadcast %4 : vector<1x128xf32> to vector<128x128xf32>
    %7 = arith.addf %5, %6 : vector<128x128xf32>
    %cst_7 = arith.constant 2.000000e+00 : f32
    %8 = vector.broadcast %cst_7 : f32 to vector<128x128xf32>
    %9 = arith.mulf %8, %2 : vector<128x128xf32>
    %10 = arith.subf %7, %9 : vector<128x128xf32>
    %cst_8 = arith.constant 1.000000e+00 : f32
    %11 = vector.broadcast %cst_8 : f32 to vector<128x128xf32>
    %12 = arith.subf %11, %10 : vector<128x128xf32>
    %cst_9 = arith.constant 0.000000e+00 : f32
    %13 = vector.broadcast %cst_9 : f32 to vector<128x128xf32>
    %14 = arith.maximumf %12, %13 : vector<128x128xf32>
    %c0_10 = arith.constant 0 : index
    %c0_11 = arith.constant 0 : index
    %15 = vector.load %arg4[%c0_10, %c0_11] : memref<128x128xbf16, #tpu.memory_space<vmem>>, vector<128x128xbf16>
    %16 = arith.extf %15 : vector<128x128xbf16> to vector<128x128xf32>
    %17 = arith.mulf %16, %14 : vector<128x128xf32>
    %18 = arith.truncf %17 : vector<128x128xf32> to vector<128x128xbf16>
    %c0_i32 = arith.constant 0 : i32
    %19 = arith.cmpi eq, %arg2, %c0_i32 : i32
    %20 = arith.extui %19 : i1 to i32
    %c0_i32_12 = arith.constant 0 : i32
    %21 = arith.cmpi ne, %20, %c0_i32_12 : i32
    scf.if %21 {
      %cst_27 = arith.constant 0.000000e+00 : f32
      %36 = vector.broadcast %cst_27 : f32 to vector<16x128xf32>
      %c0_28 = arith.constant 0 : index
      %c0_29 = arith.constant 0 : index
      %37 = vector.load %arg10[%c0_28, %c0_29] : memref<16x128xf32, #tpu.memory_space<vmem>>, vector<16x128xf32>
      tpu.vector_store %arg10[%c0_28, %c0_29], %36 {strides = array<i32>} : memref<16x128xf32, #tpu.memory_space<vmem>>, vector<16x128xf32>,
      %cst_30 = arith.constant 0.000000e+00 : f32
      %38 = vector.broadcast %cst_30 : f32 to vector<8x128xf32>
      %c0_31 = arith.constant 0 : index
      %c0_32 = arith.constant 0 : index
      %39 = vector.load %arg11[%c0_31, %c0_32] : memref<8x128xf32, #tpu.memory_space<vmem>>, vector<8x128xf32>
      tpu.vector_store %arg11[%c0_31, %c0_32], %38 {strides = array<i32>} : memref<8x128xf32, #tpu.memory_space<vmem>>, vector<8x128xf32>,
    } else {
    }
    %c0_13 = arith.constant 0 : index
    %c0_14 = arith.constant 0 : index
    %22 = vector.load %arg10[%c0_13, %c0_14] : memref<16x128xf32, #tpu.memory_space<vmem>>, vector<16x128xf32>
    %c0_15 = arith.constant 0 : index
    %c0_16 = arith.constant 0 : index
    %23 = vector.load %arg3[%c0_15, %c0_16] : memref<16x128xbf16, #tpu.memory_space<vmem>>, vector<16x128xbf16>
    %cst_17 = arith.constant dense<0.000000e+00> : vector<16x128xf32>
    %24 = tpu.matmul %23, %18, %cst_17 {dimension_numbers = #tpu.dot_dimension_numbers<[1], [0], [0], [1], [0, 0, 1, 1], [], []>} : vector<16x128xbf16>, vector<128x128xbf16>, vector<16x128xf32> -> vector<16x128xf32>
    %25 = arith.addf %22, %24 : vector<16x128xf32>
    %c0_18 = arith.constant 0 : index
    %c0_19 = arith.constant 0 : index
    %26 = vector.load %arg10[%c0_18, %c0_19] : memref<16x128xf32, #tpu.memory_space<vmem>>, vector<16x128xf32>
    tpu.vector_store %arg10[%c0_18, %c0_19], %25 {strides = array<i32>} : memref<16x128xf32, #tpu.memory_space<vmem>>, vector<16x128xf32>,
    %27 = arith.mulf %14, %14 : vector<128x128xf32>
    %c0_20 = arith.constant 0 : index
    %c0_21 = arith.constant 0 : index
    %28 = vector.load %arg11[%c0_20, %c0_21] : memref<8x128xf32, #tpu.memory_space<vmem>>, vector<8x128xf32>
    %29 = vector.shape_cast %27 : vector<128x128xf32> to vector<16x8x128xf32>
    %cst_22 = arith.constant dense<0.000000e+00> : vector<8x128xf32>
    %30 = vector.multi_reduction <add>, %29, %cst_22 [0] : vector<16x8x128xf32> to vector<8x128xf32>
    %31 = arith.addf %28, %30 : vector<8x128xf32>
    %c0_23 = arith.constant 0 : index
    %c0_24 = arith.constant 0 : index
    %32 = vector.load %arg11[%c0_23, %c0_24] : memref<8x128xf32, #tpu.memory_space<vmem>>, vector<8x128xf32>
    tpu.vector_store %arg11[%c0_23, %c0_24], %31 {strides = array<i32>} : memref<8x128xf32, #tpu.memory_space<vmem>>, vector<8x128xf32>,
    %c0_i32_25 = arith.constant 0 : i32
    %33 = arith.cmpi eq, %arg2, %c0_i32_25 : i32
    %34 = arith.extui %33 : i1 to i32
    %c0_i32_26 = arith.constant 0 : i32
    %35 = arith.cmpi ne, %34, %c0_i32_26 : i32
    scf.if %35 {
      %c0_27 = arith.constant 0 : index
      %c0_28 = arith.constant 0 : index
      %36 = vector.load %arg10[%c0_27, %c0_28] : memref<16x128xf32, #tpu.memory_space<vmem>>, vector<16x128xf32>
      %c0_29 = arith.constant 0 : index
      %c0_30 = arith.constant 0 : index
      %37 = vector.load %arg9[%c0_29, %c0_30] : memref<1x128xf32, #tpu.memory_space<vmem>>, vector<1x128xf32>
      %38 = vector.broadcast %37 : vector<1x128xf32> to vector<16x128xf32>
      %39 = arith.addf %36, %38 : vector<16x128xf32>
      %40 = arith.negf %39 : vector<16x128xf32>
      %41 = math.exp %40 : vector<16x128xf32>
      %cst_31 = arith.constant 1.000000e+00 : f32
      %42 = vector.broadcast %cst_31 : f32 to vector<16x128xf32>
      %43 = arith.addf %42, %41 : vector<16x128xf32>
      %44 = arith.divf %42, %43 : vector<16x128xf32>
      %c0_32 = arith.constant 0 : index
      %c0_33 = arith.constant 0 : index
      %45 = vector.load %arg10[%c0_32, %c0_33] : memref<16x128xf32, #tpu.memory_space<vmem>>, vector<16x128xf32>
      tpu.vector_store %arg10[%c0_32, %c0_33], %44 {strides = array<i32>} : memref<16x128xf32, #tpu.memory_space<vmem>>, vector<16x128xf32>,
    } else {
    }
    return
  }
  func.func @transform_0(%arg0: i32, %arg1: i32, %arg2: i32) -> (i32, i32) {
    %c0_i32 = arith.constant 0 : i32
    return %arg0, %arg2 : i32, i32
  }
  func.func @transform_1(%arg0: i32, %arg1: i32, %arg2: i32) -> (i32, i32) {
    %c0_i32 = arith.constant 0 : i32
    return %arg2, %arg1 : i32, i32
  }
  func.func @transform_2(%arg0: i32, %arg1: i32, %arg2: i32) -> (i32, i32) {
    %c0_i32 = arith.constant 0 : i32
    %c0_i32_0 = arith.constant 0 : i32
    return %arg2, %c0_i32 : i32, i32
  }
  func.func @transform_3(%arg0: i32, %arg1: i32, %arg2: i32) -> (i32, i32) {
    %c0_i32 = arith.constant 0 : i32
    %c0_i32_0 = arith.constant 0 : i32
    return %c0_i32, %arg1 : i32, i32
  }
  func.func @transform_4(%arg0: i32, %arg1: i32, %arg2: i32) -> (i32, i32) {
    %c0_i32 = arith.constant 0 : i32
    %c0_i32_0 = arith.constant 0 : i32
    return %arg2, %c0_i32 : i32, i32
  }
  func.func @transform_5(%arg0: i32, %arg1: i32, %arg2: i32) -> (i32, i32) {
    %c0_i32 = arith.constant 0 : i32
    %c0_i32_0 = arith.constant 0 : i32
    return %c0_i32, %arg1 : i32, i32
  }
  func.func @transform_6(%arg0: i32, %arg1: i32, %arg2: i32) -> (i32, i32) {
    %c0_i32 = arith.constant 0 : i32
    %c0_i32_0 = arith.constant 0 : i32
    return %c0_i32, %arg1 : i32, i32
  }
  func.func @transform_7(%arg0: i32, %arg1: i32, %arg2: i32) -> (i32, i32) {
    %c0_i32 = arith.constant 0 : i32
    return %arg0, %arg1 : i32, i32
  }
  func.func @transform_8(%arg0: i32, %arg1: i32, %arg2: i32) -> (i32, i32) {
    %c0_i32 = arith.constant 0 : i32
    return %arg0, %arg1 : i32, i32
  }
}

</mosaic_0001>

<llo_original>
// kernel: tpu_custom_call.1
$region0: #{tpu_custom_call.1}
  #allocation0 [shape = 'u32[]', space=smem, size = 0x4, offset = 0x4, fixed_abs, tag = 'smem constant byte address 0x4 - core index']
  #allocation1 [shape = 'u32[144,128]{1,0:T(1,128)}', space=vmem, size = 0x12000, scoped, tag = 'internal scratch']
  %s0 = inlined_call_operand.vmem [shape: bf16[16,128], index: 0, kind: input, shape index: {}]
  %s1 = inlined_call_operand.vmem [shape: bf16[128,128], index: 1, kind: input, shape index: {}]
  %s2 = inlined_call_operand.vmem [shape: f32[128,8], index: 2, kind: input, shape index: {}]
  %s3 = inlined_call_operand.vmem [shape: f32[8,128], index: 3, kind: input, shape index: {}]
  %s4 = inlined_call_operand.vmem [shape: f32[128,1], index: 4, kind: input, shape index: {}]
  %s5 = inlined_call_operand.vmem [shape: f32[1,128], index: 5, kind: input, shape index: {}]
  %s6 = inlined_call_operand.vmem [shape: f32[1,128], index: 6, kind: input, shape index: {}]
  %s7 = inlined_call_operand.hbm [shape: f32[16,128], index: 7, kind: output, shape index: {0}]
  %s8 = inlined_call_operand.hbm [shape: f32[8,128], index: 8, kind: output, shape index: {1}]
  %9 = xla_tuple %s7, %s8
  %s10 = sld [smem:[#allocation0]]
  $region54: #{tpu_custom_call.1} parent=0
    _
  %s12 = ssub.s32 1, %s10
  %s13 = scalar_select 0, %s12, %s10
  $region1: #{tpu_custom_call.1} parent=0
    #allocation2 [shape = 'u8[8192]{0}', space=vmem, size = 0x2000, scoped, tag = 'output window, operand 0, single buffered']
    #allocation3 [shape = 's32[1]{0}', space=sflag, size = 0x4, scoped, tag = 'scoped memory for tpu_custom_call.1']
    #allocation4 [shape = 'u8[4096]{0}', space=vmem, size = 0x1000, scoped, tag = 'output window, operand 1, single buffered']
    #allocation5 [shape = 's32[1]{0}', space=sflag, size = 0x4, scoped, tag = 'scoped memory for tpu_custom_call.1']
    %14 = vsyncpa [#allocation3], 0
    %15 = vsyncpa [#allocation5], 0
    // Predicated region
    $region2: #{tpu_custom_call.1} parent=1 // pred_check
      _
    $region3: #{tpu_custom_call.1} parent=1 // pred_check_branch
      %17 = sbr.rel (0) target = $region5
    $region4: #{tpu_custom_call.1} parent=1 // pred_region
      _
    $region5: #{tpu_custom_call.1} parent=1 // pred_fallthru
      _
    // Predicated region
    $region6: #{tpu_custom_call.1} parent=1 // pred_check
      _
    $region7: #{tpu_custom_call.1} parent=1 // pred_check_branch
      %19 = sbr.rel (0) target = $region9
    $region8: #{tpu_custom_call.1} parent=1 // pred_region
      _
    $region9: #{tpu_custom_call.1} parent=1 // pred_fallthru
      _
    // Predicated region
    $region10: #{tpu_custom_call.1} parent=1 // pred_check
      _
    $region11: #{tpu_custom_call.1} parent=1 // pred_check_branch
      %21 = sbr.rel (0) target = $region13
    $region12: #{tpu_custom_call.1} parent=1 // pred_region
      _
    $region13: #{tpu_custom_call.1} parent=1 // pred_fallthru
      _
    // Predicated region
    $region14: #{tpu_custom_call.1} parent=1 // pred_check
      _
    $region15: #{tpu_custom_call.1} parent=1 // pred_check_branch
      %23 = sbr.rel (0) target = $region17
    $region16: #{tpu_custom_call.1} parent=1 // pred_region
      _
    $region17: #{tpu_custom_call.1} parent=1 // pred_fallthru
      _
    // Predicated region
    $region18: #{tpu_custom_call.1} parent=1 // pred_check
      _
    $region19: #{tpu_custom_call.1} parent=1 // pred_check_branch
      %25 = sbr.rel (0) target = $region21
    $region20: #{tpu_custom_call.1} parent=1 // pred_region
      _
    $region21: #{tpu_custom_call.1} parent=1 // pred_fallthru
      _
    // Predicated region
    $region22: #{tpu_custom_call.1} parent=1 // pred_check
      _
    $region23: #{tpu_custom_call.1} parent=1 // pred_check_branch
      %27 = sbr.rel (0) target = $region25
    $region24: #{tpu_custom_call.1} parent=1 // pred_region
      _
    $region25: #{tpu_custom_call.1} parent=1 // pred_fallthru
      _
    // Predicated region
    $region26: #{tpu_custom_call.1} parent=1 // pred_check
      _
    $region27: #{tpu_custom_call.1} parent=1 // pred_check_branch
      %29 = sbr.rel (0) target = $region29
    $region28: #{tpu_custom_call.1} parent=1 // pred_region
      _
    $region29: #{tpu_custom_call.1} parent=1 // pred_fallthru
      _
    %v31 = vld [vmem:[%s2] sm:$0xff]
    %v32 = vld [vmem:[%s2 + $0x8] sm:$0xff]
    %v33 = vld [vmem:[%s2 + $0x10] sm:$0xff]
    %v34 = vld [vmem:[%s2 + $0x18] sm:$0xff]
    %v35 = vld [vmem:[%s2 + $0x20] sm:$0xff]
    %v36 = vld [vmem:[%s2 + $0x28] sm:$0xff]
    %v37 = vld [vmem:[%s2 + $0x30] sm:$0xff]
    %v38 = vld [vmem:[%s2 + $0x38] sm:$0xff]
    %v39 = vld [vmem:[%s2 + $0x40] sm:$0xff]
    %v40 = vld [vmem:[%s2 + $0x48] sm:$0xff]
    %v41 = vld [vmem:[%s2 + $0x50] sm:$0xff]
    %v42 = vld [vmem:[%s2 + $0x58] sm:$0xff]
    %v43 = vld [vmem:[%s2 + $0x60] sm:$0xff]
    %v44 = vld [vmem:[%s2 + $0x68] sm:$0xff]
    %v45 = vld [vmem:[%s2 + $0x70] sm:$0xff]
    %v46 = vld [vmem:[%s2 + $0x78] sm:$0xff]
    %v47 = vld [vmem:[%s3] sm:$0xff]
    %vm48 = vcmask 64512
    %v50 = vsel %vm48, %v31, 0
    %v53 = vsel %vm48, %v32, 0
    %v56 = vsel %vm48, %v33, 0
    %v59 = vsel %vm48, %v34, 0
    %v62 = vsel %vm48, %v35, 0
    %v65 = vsel %vm48, %v36, 0
    %v68 = vsel %vm48, %v37, 0
    %v71 = vsel %vm48, %v38, 0
    %v74 = vsel %vm48, %v39, 0
    %v77 = vsel %vm48, %v40, 0
    %v80 = vsel %vm48, %v41, 0
    %v83 = vsel %vm48, %v42, 0
    %v86 = vsel %vm48, %v43, 0
    %v89 = vsel %vm48, %v44, 0
    %v92 = vsel %vm48, %v45, 0
    %v95 = vsel %vm48, %v46, 0
    %97 = vmatprep.subr.mxu0 0.0
    %98 = vmatpush1.msra.mxu0 %v47
    %99 = vmatprep.subr.mxu0 0.0
    %100 = vmatpush1.msra.mxu0 0.0
    %101 = vmatprep.subr.mxu0 0.0
    %102 = vmatpush1.msra.mxu0 0.0
    %103 = vmatprep.subr.mxu0 0.0
    %104 = vmatpush1.msra.mxu0 0.0
    %105 = vmatprep.subr.mxu0 0.0
    %106 = vmatpush1.msra.mxu0 0.0
    %107 = vmatprep.subr.mxu0 0.0
    %108 = vmatpush1.msra.mxu0 0.0
    %109 = vmatprep.subr.mxu0 0.0
    %110 = vmatpush1.msra.mxu0 0.0
    %111 = vmatprep.subr.mxu0 0.0
    %112 = vmatpush1.msra.mxu0 0.0
    %113 = vmatprep.subr.mxu0 0.0
    %114 = vmatpush1.msra.mxu0 0.0
    %115 = vmatprep.subr.mxu0 0.0
    %116 = vmatpush1.msra.mxu0 0.0
    %117 = vmatprep.subr.mxu0 0.0
    %118 = vmatpush1.msra.mxu0 0.0
    %119 = vmatprep.subr.mxu0 0.0
    %120 = vmatpush1.msra.mxu0 0.0
    %121 = vmatprep.subr.mxu0 0.0
    %122 = vmatpush1.msra.mxu0 0.0
    %123 = vmatprep.subr.mxu0 0.0
    %124 = vmatpush1.msra.mxu0 0.0
    %125 = vmatprep.subr.mxu0 0.0
    %126 = vmatpush1.msra.mxu0 0.0
    %127 = vmatprep.subr.mxu0 0.0
    %128 = vmatpush1.msra.mxu0 0.0
    %129 = vmatprep.subr.mxu0 0.0
    %130 = vmatpush1.msra.mxu0 0.0
    %131 = vmatprep.subr.mxu0 0.0
    %132 = vmatpush1.msra.mxu0 0.0
    %133 = vmatprep.subr.mxu0 0.0
    %134 = vmatpush1.msra.mxu0 0.0
    %135 = vmatprep.subr.mxu0 0.0
    %136 = vmatpush1.msra.mxu0 0.0
    %137 = vmatprep.subr.mxu0 0.0
    %138 = vmatpush1.msra.mxu0 0.0
    %139 = vmatprep.subr.mxu0 0.0
    %140 = vmatpush1.msra.mxu0 0.0
    %141 = vmatprep.subr.mxu0 0.0
    %142 = vmatpush1.msra.mxu0 0.0
    %143 = vmatprep.subr.mxu0 0.0
    %144 = vmatpush1.msra.mxu0 0.0
    %145 = vmatprep.subr.mxu0 0.0
    %146 = vmatpush1.msra.mxu0 0.0
    %147 = vmatprep.subr.mxu0 0.0
    %148 = vmatpush1.msra.mxu0 0.0
    %149 = vmatprep.subr.mxu0 0.0
    %150 = vmatpush1.msra.mxu0 0.0
    %151 = vmatprep.subr.mxu0 0.0
    %152 = vmatpush1.msra.mxu0 0.0
    %153 = vmatprep.subr.mxu0 0.0
    %154 = vmatpush1.msra.mxu0 0.0
    %155 = vmatprep.subr.mxu0 0.0
    %156 = vmatpush1.msra.mxu0 0.0
    %157 = vmatprep.subr.mxu0 0.0
    %158 = vmatpush1.msra.mxu0 0.0
    %159 = vmatprep.subr.mxu0 0.0
    %160 = vmatpush1.msra.mxu0 0.0
    %161 = vmatprep.mubr.f32.mxu0 0.0
    %162 = vmatmul.mubr.f32.gmra.mrb[0].mxu0 %v50
    %v163 = vpop.f32.mrb[0].mxu0
    %v164 = vadd.f32 0.0, %v163
    %v165 = vpop.f32.mrb[0].mxu0
    %166 = vmatprep.mubr.f32.mxu0 0.0
    %167 = vmatmul.mubr.f32.gmra.mrb[0].mxu0 %v53
    %v168 = vpop.f32.mrb[0].mxu0
    %v169 = vadd.f32 0.0, %v168
    %v170 = vpop.f32.mrb[0].mxu0
    %171 = vmatprep.mubr.f32.mxu0 0.0
    %172 = vmatmul.mubr.f32.gmra.mrb[0].mxu0 %v56
    %v173 = vpop.f32.mrb[0].mxu0
    %v174 = vadd.f32 0.0, %v173
    %v175 = vpop.f32.mrb[0].mxu0
    %176 = vmatprep.mubr.f32.mxu0 0.0
    %177 = vmatmul.mubr.f32.gmra.mrb[0].mxu0 %v59
    %v178 = vpop.f32.mrb[0].mxu0
    %v179 = vadd.f32 0.0, %v178
    %v180 = vpop.f32.mrb[0].mxu0
    %181 = vmatprep.mubr.f32.mxu0 0.0
    %182 = vmatmul.mubr.f32.gmra.mrb[0].mxu0 %v62
    %v183 = vpop.f32.mrb[0].mxu0
    %v184 = vadd.f32 0.0, %v183
    %v185 = vpop.f32.mrb[0].mxu0
    %186 = vmatprep.mubr.f32.mxu0 0.0
    %187 = vmatmul.mubr.f32.gmra.mrb[0].mxu0 %v65
    %v188 = vpop.f32.mrb[0].mxu0
    %v189 = vadd.f32 0.0, %v188
    %v190 = vpop.f32.mrb[0].mxu0
    %191 = vmatprep.mubr.f32.mxu0 0.0
    %192 = vmatmul.mubr.f32.gmra.mrb[0].mxu0 %v68
    %v193 = vpop.f32.mrb[0].mxu0
    %v194 = vadd.f32 0.0, %v193
    %v195 = vpop.f32.mrb[0].mxu0
    %196 = vmatprep.mubr.f32.mxu0 0.0
    %197 = vmatmul.mubr.f32.gmra.mrb[0].mxu0 %v71
    %v198 = vpop.f32.mrb[0].mxu0
    %v199 = vadd.f32 0.0, %v198
    %v200 = vpop.f32.mrb[0].mxu0
    %201 = vmatprep.mubr.f32.mxu0 0.0
    %202 = vmatmul.mubr.f32.gmra.mrb[0].mxu0 %v74
    %v203 = vpop.f32.mrb[0].mxu0
    %v204 = vadd.f32 0.0, %v203
    %v205 = vpop.f32.mrb[0].mxu0
    %206 = vmatprep.mubr.f32.mxu0 0.0
    %207 = vmatmul.mubr.f32.gmra.mrb[0].mxu0 %v77
    %v208 = vpop.f32.mrb[0].mxu0
    %v209 = vadd.f32 0.0, %v208
    %v210 = vpop.f32.mrb[0].mxu0
    %211 = vmatprep.mubr.f32.mxu0 0.0
    %212 = vmatmul.mubr.f32.gmra.mrb[0].mxu0 %v80
    %v213 = vpop.f32.mrb[0].mxu0
    %v214 = vadd.f32 0.0, %v213
    %v215 = vpop.f32.mrb[0].mxu0
    %216 = vmatprep.mubr.f32.mxu0 0.0
    %217 = vmatmul.mubr.f32.gmra.mrb[0].mxu0 %v83
    %v218 = vpop.f32.mrb[0].mxu0
    %v219 = vadd.f32 0.0, %v218
    %v220 = vpop.f32.mrb[0].mxu0
    %221 = vmatprep.mubr.f32.mxu0 0.0
    %222 = vmatmul.mubr.f32.gmra.mrb[0].mxu0 %v86
    %v223 = vpop.f32.mrb[0].mxu0
    %v224 = vadd.f32 0.0, %v223
    %v225 = vpop.f32.mrb[0].mxu0
    %226 = vmatprep.mubr.f32.mxu0 0.0
    %227 = vmatmul.mubr.f32.gmra.mrb[0].mxu0 %v89
    %v228 = vpop.f32.mrb[0].mxu0
    %v229 = vadd.f32 0.0, %v228
    %v230 = vpop.f32.mrb[0].mxu0
    %231 = vmatprep.mubr.f32.mxu0 0.0
    %232 = vmatmul.mubr.f32.gmra.mrb[0].mxu0 %v92
    %v233 = vpop.f32.mrb[0].mxu0
    %v234 = vadd.f32 0.0, %v233
    %v235 = vpop.f32.mrb[0].mxu0
    %236 = vmatprep.mubr.f32.mxu0 0.0
    %237 = vmatmul.mubr.f32.gmra.mrb[0].mxu0 %v95
    %v238 = vpop.f32.mrb[0].mxu0
    %v239 = vadd.f32 0.0, %v238
    %v240 = vpop.f32.mrb[0].mxu0
    %241 = vdwg.mxu0
    %v242 = vld [vmem:[%s4] sm:$0xff]
    %v243 = vld [vmem:[%s4 + $0x8] sm:$0xff]
    %v244 = vld [vmem:[%s4 + $0x10] sm:$0xff]
    %v245 = vld [vmem:[%s4 + $0x18] sm:$0xff]
    %v246 = vld [vmem:[%s4 + $0x20] sm:$0xff]
    %v247 = vld [vmem:[%s4 + $0x28] sm:$0xff]
    %v248 = vld [vmem:[%s4 + $0x30] sm:$0xff]
    %v249 = vld [vmem:[%s4 + $0x38] sm:$0xff]
    %v250 = vld [vmem:[%s4 + $0x40] sm:$0xff]
    %v251 = vld [vmem:[%s4 + $0x48] sm:$0xff]
    %v252 = vld [vmem:[%s4 + $0x50] sm:$0xff]
    %v253 = vld [vmem:[%s4 + $0x58] sm:$0xff]
    %v254 = vld [vmem:[%s4 + $0x60] sm:$0xff]
    %v255 = vld [vmem:[%s4 + $0x68] sm:$0xff]
    %v256 = vld [vmem:[%s4 + $0x70] sm:$0xff]
    %v257 = vld [vmem:[%s4 + $0x78] sm:$0xff]
    %v258 = vld [vmem:[%s5] sm:$0x1]
    %260 = vset.pattern.permute.xlu0 0
    %261 = vperm.xlu0 %260, %v242
    %v262 = vpop.permute.xlu0 %261
    %265 = vset.pattern.permute.xlu0 0
    %266 = vperm.xlu0 %265, %v243
    %v267 = vpop.permute.xlu0 %266
    %270 = vset.pattern.permute.xlu0 0
    %271 = vperm.xlu0 %270, %v244
    %v272 = vpop.permute.xlu0 %271
    %275 = vset.pattern.permute.xlu0 0
    %276 = vperm.xlu0 %275, %v245
    %v277 = vpop.permute.xlu0 %276
    %280 = vset.pattern.permute.xlu0 0
    %281 = vperm.xlu0 %280, %v246
    %v282 = vpop.permute.xlu0 %281
    %285 = vset.pattern.permute.xlu0 0
    %286 = vperm.xlu0 %285, %v247
    %v287 = vpop.permute.xlu0 %286
    %290 = vset.pattern.permute.xlu0 0
    %291 = vperm.xlu0 %290, %v248
    %v292 = vpop.permute.xlu0 %291
    %295 = vset.pattern.permute.xlu0 0
    %296 = vperm.xlu0 %295, %v249
    %v297 = vpop.permute.xlu0 %296
    %300 = vset.pattern.permute.xlu0 0
    %301 = vperm.xlu0 %300, %v250
    %v302 = vpop.permute.xlu0 %301
    %305 = vset.pattern.permute.xlu0 0
    %306 = vperm.xlu0 %305, %v251
    %v307 = vpop.permute.xlu0 %306
    %310 = vset.pattern.permute.xlu0 0
    %311 = vperm.xlu0 %310, %v252
    %v312 = vpop.permute.xlu0 %311
    %315 = vset.pattern.permute.xlu0 0
    %316 = vperm.xlu0 %315, %v253
    %v317 = vpop.permute.xlu0 %316
    %320 = vset.pattern.permute.xlu0 0
    %321 = vperm.xlu0 %320, %v254
    %v322 = vpop.permute.xlu0 %321
    %325 = vset.pattern.permute.xlu0 0
    %326 = vperm.xlu0 %325, %v255
    %v327 = vpop.permute.xlu0 %326
    %330 = vset.pattern.permute.xlu0 0
    %331 = vperm.xlu0 %330, %v256
    %v332 = vpop.permute.xlu0 %331
    %335 = vset.pattern.permute.xlu0 0
    %336 = vperm.xlu0 %335, %v257
    %v337 = vpop.permute.xlu0 %336
    %v340 = vlaneseq
    %v341 = vshrl.u32 %v340, 7
    %v342 = vsub.s32 0, %v341
    %v343 = vrot.slane %v258, %v342
    %v345 = vadd.f32 %v262, %v343
    %v346 = vadd.f32 %v267, %v343
    %v347 = vadd.f32 %v272, %v343
    %v348 = vadd.f32 %v277, %v343
    %v349 = vadd.f32 %v282, %v343
    %v350 = vadd.f32 %v287, %v343
    %v351 = vadd.f32 %v292, %v343
    %v352 = vadd.f32 %v297, %v343
    %v353 = vadd.f32 %v302, %v343
    %v354 = vadd.f32 %v307, %v343
    %v355 = vadd.f32 %v312, %v343
    %v356 = vadd.f32 %v317, %v343
    %v357 = vadd.f32 %v322, %v343
    %v358 = vadd.f32 %v327, %v343
    %v359 = vadd.f32 %v332, %v343
    %v360 = vadd.f32 %v337, %v343
    %v361 = vmul.f32 %v164, 2.0
    %v362 = vmul.f32 %v169, 2.0
    %v363 = vmul.f32 %v174, 2.0
    %v364 = vmul.f32 %v179, 2.0
    %v365 = vmul.f32 %v184, 2.0
    %v366 = vmul.f32 %v189, 2.0
    %v367 = vmul.f32 %v194, 2.0
    %v368 = vmul.f32 %v199, 2.0
    %v369 = vmul.f32 %v204, 2.0
    %v370 = vmul.f32 %v209, 2.0
    %v371 = vmul.f32 %v214, 2.0
    %v372 = vmul.f32 %v219, 2.0
    %v373 = vmul.f32 %v224, 2.0
    %v374 = vmul.f32 %v229, 2.0
    %v375 = vmul.f32 %v234, 2.0
    %v376 = vmul.f32 %v239, 2.0
    %v377 = vsub.f32 %v345, %v361
    %v378 = vsub.f32 %v346, %v362
    %v379 = vsub.f32 %v347, %v363
    %v380 = vsub.f32 %v348, %v364
    %v381 = vsub.f32 %v349, %v365
    %v382 = vsub.f32 %v350, %v366
    %v383 = vsub.f32 %v351, %v367
    %v384 = vsub.f32 %v352, %v368
    %v385 = vsub.f32 %v353, %v369
    %v386 = vsub.f32 %v354, %v370
    %v387 = vsub.f32 %v355, %v371
    %v388 = vsub.f32 %v356, %v372
    %v389 = vsub.f32 %v357, %v373
    %v390 = vsub.f32 %v358, %v374
    %v391 = vsub.f32 %v359, %v375
    %v392 = vsub.f32 %v360, %v376
    %v393 = vsub.f32 1.0, %v377
    %v394 = vsub.f32 1.0, %v378
    %v395 = vsub.f32 1.0, %v379
    %v396 = vsub.f32 1.0, %v380
    %v397 = vsub.f32 1.0, %v381
    %v398 = vsub.f32 1.0, %v382
    %v399 = vsub.f32 1.0, %v383
    %v400 = vsub.f32 1.0, %v384
    %v401 = vsub.f32 1.0, %v385
    %v402 = vsub.f32 1.0, %v386
    %v403 = vsub.f32 1.0, %v387
    %v404 = vsub.f32 1.0, %v388
    %v405 = vsub.f32 1.0, %v389
    %v406 = vsub.f32 1.0, %v390
    %v407 = vsub.f32 1.0, %v391
    %v408 = vsub.f32 1.0, %v392
    %v409 = vmax.f32 %v393, 0.0
    %v410 = vmax.f32 %v394, 0.0
    %v411 = vmax.f32 %v395, 0.0
    %v412 = vmax.f32 %v396, 0.0
    %v413 = vmax.f32 %v397, 0.0
    %v414 = vmax.f32 %v398, 0.0
    %v415 = vmax.f32 %v399, 0.0
    %v416 = vmax.f32 %v400, 0.0
    %v417 = vmax.f32 %v401, 0.0
    %v418 = vmax.f32 %v402, 0.0
    %v419 = vmax.f32 %v403, 0.0
    %v420 = vmax.f32 %v404, 0.0
    %v421 = vmax.f32 %v405, 0.0
    %v422 = vmax.f32 %v406, 0.0
    %v423 = vmax.f32 %v407, 0.0
    %v424 = vmax.f32 %v408, 0.0
    %v425 = vld [vmem:[%s1] sm:$0xf]
    %v426 = vld [vmem:[%s1 + $0x4] sm:$0xf]
    %v427 = vld [vmem:[%s1 + $0x8] sm:$0xf]
    %v428 = vld [vmem:[%s1 + $0xc] sm:$0xf]
    %v429 = vld [vmem:[%s1 + $0x10] sm:$0xf]
    %v430 = vld [vmem:[%s1 + $0x14] sm:$0xf]
    %v431 = vld [vmem:[%s1 + $0x18] sm:$0xf]
    %v432 = vld [vmem:[%s1 + $0x1c] sm:$0xf]
    %v433 = vld [vmem:[%s1 + $0x20] sm:$0xf]
    %v434 = vld [vmem:[%s1 + $0x24] sm:$0xf]
    %v435 = vld [vmem:[%s1 + $0x28] sm:$0xf]
    %v436 = vld [vmem:[%s1 + $0x2c] sm:$0xf]
    %v437 = vld [vmem:[%s1 + $0x30] sm:$0xf]
    %v438 = vld [vmem:[%s1 + $0x34] sm:$0xf]
    %v439 = vld [vmem:[%s1 + $0x38] sm:$0xf]
    %v440 = vld [vmem:[%s1 + $0x3c] sm:$0xf]
    %v441 = vunpack.c.l.bf16 %v425
    %v442 = vunpack.c.l.bf16 %v426
    %v443 = vunpack.c.l.bf16 %v427
    %v444 = vunpack.c.l.bf16 %v428
    %v445 = vunpack.c.l.bf16 %v429
    %v446 = vunpack.c.l.bf16 %v430
    %v447 = vunpack.c.l.bf16 %v431
    %v448 = vunpack.c.l.bf16 %v432
    %v449 = vunpack.c.l.bf16 %v433
    %v450 = vunpack.c.l.bf16 %v434
    %v451 = vunpack.c.l.bf16 %v435
    %v452 = vunpack.c.l.bf16 %v436
    %v453 = vunpack.c.l.bf16 %v437
    %v454 = vunpack.c.l.bf16 %v438
    %v455 = vunpack.c.l.bf16 %v439
    %v456 = vunpack.c.l.bf16 %v440
    %v457 = vmul.f32 %v441, %v409
    %v458 = vmul.f32 %v442, %v410
    %v459 = vmul.f32 %v443, %v411
    %v460 = vmul.f32 %v444, %v412
    %v461 = vmul.f32 %v445, %v413
    %v462 = vmul.f32 %v446, %v414
    %v463 = vmul.f32 %v447, %v415
    %v464 = vmul.f32 %v448, %v416
    %v465 = vmul.f32 %v449, %v417
    %v466 = vmul.f32 %v450, %v418
    %v467 = vmul.f32 %v451, %v419
    %v468 = vmul.f32 %v452, %v420
    %v469 = vmul.f32 %v453, %v421
    %v470 = vmul.f32 %v454, %v422
    %v471 = vmul.f32 %v455, %v423
    %v472 = vmul.f32 %v456, %v424
    %v473 = vpack.c.bf16 %v458, %v457
    %v474 = vpack.c.bf16 %v460, %v459
    %v475 = vpack.c.bf16 %v462, %v461
    %v476 = vpack.c.bf16 %v464, %v463
    %v477 = vpack.c.bf16 %v466, %v465
    %v478 = vpack.c.bf16 %v468, %v467
    %v479 = vpack.c.bf16 %v470, %v469
    %v480 = vpack.c.bf16 %v472, %v471
    %p481 = scmp.eq.s32.totalorder 0, 0
    // Predicated region
    $region30: #{tpu_custom_call.1} parent=1 // pred_check
      %p482 = pneg %p481
    $region31: #{tpu_custom_call.1} parent=1 // pred_check_branch
      %484 = sbr.rel (%p482) target = $region33
    $region32: #{tpu_custom_call.1} parent=1 // pred_region
      %485 = vst [vmem:[#allocation2] sm:$0xff] 0.0
      %486 = vst [vmem:[#allocation2 + $0x8] sm:$0xff] 0.0
      %487 = vst [vmem:[#allocation4] sm:$0xff] 0.0
    $region33: #{tpu_custom_call.1} parent=1 // pred_fallthru
      _
    %v488 = vld [vmem:[#allocation2] sm:$0xff]
    %v489 = vld [vmem:[#allocation2 + $0x8] sm:$0xff]
    %v490 = vld [vmem:[%s0] sm:$0xf]
    %v491 = vld [vmem:[%s0 + $0x4] sm:$0xf]
    %v494 = vunpack.c.l.b16 %v490
    %v495 = vunpack.c.l.b16 %v491
    %v496 = vpack.c.b16 %v495, %v494
    %498 = vmatprep.subr.bf16.mxu0 0
    %499 = vmatpush1.bf16.msra.mxu0 %v473
    %500 = vmatprep.subr.bf16.mxu0 0
    %501 = vmatpush1.bf16.msra.mxu0 %v474
    %502 = vmatprep.subr.bf16.mxu0 0
    %503 = vmatpush1.bf16.msra.mxu0 %v475
    %504 = vmatprep.subr.bf16.mxu0 0
    %505 = vmatpush1.bf16.msra.mxu0 %v476
    %506 = vmatprep.subr.bf16.mxu0 0
    %507 = vmatpush1.bf16.msra.mxu0 %v477
    %508 = vmatprep.subr.bf16.mxu0 0
    %509 = vmatpush1.bf16.msra.mxu0 %v478
    %510 = vmatprep.subr.bf16.mxu0 0
    %511 = vmatpush1.bf16.msra.mxu0 %v479
    %512 = vmatprep.subr.bf16.mxu0 0
    %513 = vmatpush1.bf16.msra.mxu0 %v480
    %514 = vmatprep.subr.bf16.mxu0 0
    %515 = vmatpush1.bf16.msra.mxu0 0
    %516 = vmatprep.subr.bf16.mxu0 0
    %517 = vmatpush1.bf16.msra.mxu0 0
    %518 = vmatprep.subr.bf16.mxu0 0
    %519 = vmatpush1.bf16.msra.mxu0 0
    %520 = vmatprep.subr.bf16.mxu0 0
    %521 = vmatpush1.bf16.msra.mxu0 0
    %522 = vmatprep.subr.bf16.mxu0 0
    %523 = vmatpush1.bf16.msra.mxu0 0
    %524 = vmatprep.subr.bf16.mxu0 0
    %525 = vmatpush1.bf16.msra.mxu0 0
    %526 = vmatprep.subr.bf16.mxu0 0
    %527 = vmatpush1.bf16.msra.mxu0 0
    %528 = vmatprep.subr.bf16.mxu0 0
    %529 = vmatpush1.bf16.msra.mxu0 0
    %530 = vmatprep.mubr.bf16.mxu0 0
    %531 = vmatmul.mubr.bf16.gmra.mrb[0].mxu0 %v496
    %v532 = vpop.f32.mrb[0].mxu0
    %v533 = vadd.f32 0.0, %v532
    %v534 = vpop.f32.mrb[0].mxu0
    %v535 = vpop.f32.mrb[0].mxu0
    %v536 = vadd.f32 0.0, %v535
    %v537 = vpop.f32.mrb[0].mxu0
    %538 = vdwg.mxu0
    %v539 = vadd.f32 %v488, %v533
    %v540 = vadd.f32 %v489, %v536
    %541 = vst [vmem:[#allocation2] sm:$0xff] %v539
    %542 = vst [vmem:[#allocation2 + $0x8] sm:$0xff] %v540
    %v543 = vmul.f32 %v409, %v409
    %v544 = vmul.f32 %v410, %v410
    %v545 = vmul.f32 %v411, %v411
    %v546 = vmul.f32 %v412, %v412
    %v547 = vmul.f32 %v413, %v413
    %v548 = vmul.f32 %v414, %v414
    %v549 = vmul.f32 %v415, %v415
    %v550 = vmul.f32 %v416, %v416
    %v551 = vmul.f32 %v417, %v417
    %v552 = vmul.f32 %v418, %v418
    %v553 = vmul.f32 %v419, %v419
    %v554 = vmul.f32 %v420, %v420
    %v555 = vmul.f32 %v421, %v421
    %v556 = vmul.f32 %v422, %v422
    %v557 = vmul.f32 %v423, %v423
    %v558 = vmul.f32 %v424, %v424
    %v559 = vld [vmem:[#allocation4] sm:$0xff]
    %v560 = vadd.f32 %v543, %v544
    %v561 = vadd.f32 %v560, %v545
    %v562 = vadd.f32 %v561, %v546
    %v563 = vadd.f32 %v562, %v547
    %v564 = vadd.f32 %v563, %v548
    %v565 = vadd.f32 %v564, %v549
    %v566 = vadd.f32 %v565, %v550
    %v567 = vadd.f32 %v566, %v551
    %v568 = vadd.f32 %v567, %v552
    %v569 = vadd.f32 %v568, %v553
    %v570 = vadd.f32 %v569, %v554
    %v571 = vadd.f32 %v570, %v555
    %v572 = vadd.f32 %v571, %v556
    %v573 = vadd.f32 %v572, %v557
    %v574 = vadd.f32 %v573, %v558
    %v575 = vadd.f32 %v559, %v574
    %576 = vst [vmem:[#allocation4] sm:$0xff] %v575
    // Predicated region
    $region34: #{tpu_custom_call.1} parent=1 // pred_check
      %p577 = pneg %p481
    $region35: #{tpu_custom_call.1} parent=1 // pred_check_branch
      %579 = sbr.rel (%p577) target = $region37
    $region36: #{tpu_custom_call.1} parent=1 // pred_region
      %v580 = vld [vmem:[#allocation2] sm:$0xff]
      %v581 = vld [vmem:[#allocation2 + $0x8] sm:$0xff]
      %v582 = vld [vmem:[%s6] sm:$0x1]
      %v584 = vlaneseq
      %v585 = vshrl.u32 %v584, 7
      %v586 = vsub.s32 0, %v585
      %v587 = vrot.slane %v582, %v586
      %v589 = vadd.f32 %v580, %v587
      %v590 = vadd.f32 %v581, %v587
      %v591 = vxor.u32 %v589, 2147483648
      %v592 = vxor.u32 %v590, 2147483648
      %v593 = vmul.f32 %v591, 1.442695
      %v594 = vpow.pop %v593
      %v595 = vmul.f32 %v592, 1.442695
      %v596 = vpow.pop %v595
      %v597 = vadd.f32 %v594, 1.0
      %v598 = vadd.f32 %v596, 1.0
      %v599 = vrcp.pop %v597
      %v600 = vmul.f32 1.0, %v599
      %v601 = vrcp.pop %v598
      %v602 = vmul.f32 1.0, %v601
      %603 = vst [vmem:[#allocation2] sm:$0xff] %v600
      %604 = vst [vmem:[#allocation2 + $0x8] sm:$0xff] %v602
    $region37: #{tpu_custom_call.1} parent=1 // pred_fallthru
      _
    // Predicated region
    $region38: #{tpu_custom_call.1} parent=1 // pred_check
      _
    $region39: #{tpu_custom_call.1} parent=1 // pred_check_branch
      %606 = sbr.rel (0) target = $region41
    $region40: #{tpu_custom_call.1} parent=1 // pred_region
      %s608 = ssub.s32 256, 256
      %609 = vsyncadd [#allocation3], %s608
      %s610 = sshll.u32 [#allocation2], 4
      %s611 = int_to_ptr.vmem [resolvable:$true] %s610
      %616 = dma.vmem_to_hbm [thread:$0]  %s611, 256, %s7, [#allocation3], 128, 128, 8
    $region41: #{tpu_custom_call.1} parent=1 // pred_fallthru
      _
    // Predicated region
    $region42: #{tpu_custom_call.1} parent=1 // pred_check
      _
    $region43: #{tpu_custom_call.1} parent=1 // pred_check_branch
      %618 = sbr.rel (0) target = $region45
    $region44: #{tpu_custom_call.1} parent=1 // pred_region
      %s620 = ssub.s32 128, 128
      %621 = vsyncadd [#allocation5], %s620
      %s623 = sshll.u32 [#allocation4], 4
      %s624 = int_to_ptr.vmem [resolvable:$true] %s623
      %626 = dma.vmem_to_hbm [thread:$0]  %s624, 128, %s8, [#allocation5]
    $region45: #{tpu_custom_call.1} parent=1 // pred_fallthru
      _
    // Predicated region
    $region46: #{tpu_custom_call.1} parent=1 // pred_check
      _
    $region47: #{tpu_custom_call.1} parent=1 // pred_check_branch
      %628 = sbr.rel (0) target = $region49
    $region48: #{tpu_custom_call.1} parent=1 // pred_region
      %629 = dma.done [#allocation3], 256
    $region49: #{tpu_custom_call.1} parent=1 // pred_fallthru
      _
    // Predicated region
    $region50: #{tpu_custom_call.1} parent=1 // pred_check
      _
    $region51: #{tpu_custom_call.1} parent=1 // pred_check_branch
      %631 = sbr.rel (0) target = $region53
    $region52: #{tpu_custom_call.1} parent=1 // pred_region
      %632 = dma.done [#allocation5], 128
    $region53: #{tpu_custom_call.1} parent=1 // pred_fallthru
      _
    %633 = vsyncpa [#allocation3], 1
    %634 = vsyncpa [#allocation5], 1

</llo_original>
